<compile_context>
chip_gen: v6e
topology: v6e:2x2x1
jax: 0.10.0
libtpu: 0.0.40
codegen_flags: <defaults>
</compile_context>

<pallas_src>
import functools

import jax
import jax.numpy as jnp
from jax.experimental import pallas as pl
from jax.experimental.pallas import tpu as pltpu

NEG_SLOPE = 0.2  # PyTorch nn.LeakyReLU default used by act_layer('leakyrelu')


def _fused_mlp_kernel(*refs, n_layers, neg_slope, dot_dtype):
    """refs = (x_ref, w0, b0, w1, b1, ..., w_{L-1}, b_{L-1}, o_ref).

    Channel-major (transposed) layout: x_ref is [C0, tm] (batch on lanes),
    weights are [C_out, C_in] (PyTorch layout), biases [C_out, 1].
    All intermediate activations stay in VMEM / vregs — no HBM traffic
    between layers.
    """
    x_ref = refs[0]
    o_ref = refs[-1]

    h = x_ref[...].astype(jnp.float32)                     # [C_in, tm]
    for i in range(n_layers):
        w = refs[1 + 2 * i][...]                           # [C_out, C_in]
        b = refs[2 + 2 * i][...].astype(jnp.float32)       # [C_out, 1] -> lanes bcast
        if dot_dtype is not None:
            lhs, rhs = w.astype(dot_dtype), h.astype(dot_dtype)
        else:
            lhs, rhs = w.astype(jnp.float32), h
        y = jnp.dot(lhs, rhs, preferred_element_type=jnp.float32) + b  # [C_out, tm]
        h = jnp.maximum(y, neg_slope * y)                  # LeakyReLU (f32 on VPU)
    o_ref[...] = h.astype(o_ref.dtype)


def _round_up(x, m):
    return ((x + m - 1) // m) * m


def mlp_forward(x, params, *, neg_slope=NEG_SLOPE, block_m=2048, dot_dtype=None):
    """Fused MLP forward.

    x:      [M, C0]                                   (same interface as PyTorch)
    params: [(W_i [C_i, C_{i-1}], b_i [C_i]), ...]    (PyTorch nn.Linear layout)
    dot_dtype: None -> f32 MXU path; jnp.bfloat16 -> bf16 MXU path (v6e/v7x).
    """
    M, C0 = x.shape
    n_layers = len(params)
    channels = [C0] + [w.shape[0] for (w, _) in params]
    for i, (w, b) in enumerate(params):
        assert w.shape == (channels[i + 1], channels[i]), (w.shape, i)
        assert b.shape == (channels[i + 1],), (b.shape, i)

    # ---- batch tile (lane axis) --------------------------------------------
    if M <= 512:
        tm = M  # single full-extent block (always layout-legal)
    else:
        # >=2 blocks so both v7x TensorCores get work; lane-aligned to 128.
        tm = max(128, min(block_m, _round_up(pl.cdiv(M, 2), 128)))
    grid = (pl.cdiv(M, tm),)

    # ---- VMEM budget for the fully-resident-weights strategy ----------------
    itemsize = jnp.dtype(x.dtype).itemsize
    param_bytes = sum(w.size * w.dtype.itemsize + b.size * b.dtype.itemsize
                      for (w, b) in params)
    est_vmem = (
        2 * param_bytes                                       # default double-buffering
        + 2 * (channels[0] + channels[-1]) * tm * itemsize    # in/out tiles, double-buffered
        + 2 * max(channels) * tm * 4                          # live f32 intermediates headroom
    )
    VMEM_BUDGET = 40 * 1024 * 1024  # conservative: fits v7x's 64 MiB physical VMEM
    if est_vmem > VMEM_BUDGET:
        # TODO(synk): K/N-tile wide layers (or pltpu.emit_pipeline over weight
        # tiles) instead of keeping every weight fully resident in VMEM.
        raise ValueError(
            f"MLP weights too large for the fully-resident VMEM strategy "
            f"(~{est_vmem} bytes estimated > {VMEM_BUDGET}).")
    vmem_limit = int(min(max(32 * 1024 * 1024, 2 * est_vmem), 60 * 1024 * 1024))

    # ---- specs (transposed, channel-major layout) ----------------------------
    in_specs = [pl.BlockSpec((C0, tm), lambda i: (0, i))]
    flat_params = []
    for (w, b) in params:
        cout, cin = w.shape
        # Full-array blocks with constant block index -> loaded once, resident.
        in_specs.append(pl.BlockSpec((cout, cin), lambda i: (0, 0)))
        in_specs.append(pl.BlockSpec((cout, 1), lambda i: (0, 0)))
        flat_params.append(w)
        flat_params.append(b.reshape(cout, 1))

    flops = 2 * M * sum(channels[i] * channels[i + 1] for i in range(n_layers))
    bytes_accessed = (x.size * itemsize + param_bytes + M * channels[-1] * itemsize)

    kernel = functools.partial(
        _fused_mlp_kernel, n_layers=n_layers, neg_slope=neg_slope,
        dot_dtype=dot_dtype)

    out_t = pl.pallas_call(
        kernel,
        out_shape=jax.ShapeDtypeStruct((channels[-1], M), x.dtype),
        grid_spec=pltpu.PrefetchScalarGridSpec(
            num_scalar_prefetch=0,
            grid=grid,
            in_specs=in_specs,
            out_specs=pl.BlockSpec((channels[-1], tm), lambda i: (0, i)),
        ),
        compiler_params=pltpu.CompilerParams(
            dimension_semantics=("parallel",),
            vmem_limit_bytes=vmem_limit,
        ),
        cost_estimate=pl.CostEstimate(
            flops=flops, transcendentals=0, bytes_accessed=bytes_accessed),
    )(x.T, *flat_params)

    return out_t.T  # back to [M, C_last]


def init_mlp_params(key, channels, dtype=jnp.float32):
    """Deterministic parameter init, PyTorch nn.Linear layout: W [C_out, C_in]."""
    params = []
    for i in range(1, len(channels)):
        key, kw, kb = jax.random.split(key, 3)
        fan_in = channels[i - 1]
        bound = 1.0 / float(fan_in) ** 0.5
        w = jax.random.uniform(kw, (channels[i], channels[i - 1]), dtype, -bound, bound)
        b = jax.random.uniform(kb, (channels[i],), dtype, -bound, bound)
        params.append((w, b))
    return params


def mlp_reference(x, params, neg_slope=NEG_SLOPE):
    """Pure-JAX reference (matches the PyTorch forward)."""
    for w, b in params:
        y = x @ w.T + b
        x = jnp.where(y >= 0, y, neg_slope * y)
    return x


if __name__ == "__main__":
    key = jax.random.PRNGKey(0)
    channels = [16, 32, 8]  # MLP(channels=[16, 32, 8]), act='leakyrelu', norm=None
    batch = 4

    kx, kp = jax.random.split(key)
    x = jax.random.normal(kx, (batch, channels[0]), jnp.float32)
    params = init_mlp_params(kp, channels)

    out = mlp_forward(x, params)
    out = jax.block_until_ready(out)

    ref = mlp_reference(x, params)
    assert out.shape == (batch, channels[-1])
    assert jnp.allclose(out, ref, atol=1e-5, rtol=1e-5)

    print("KERNEL_OK")
</pallas_src>

<mosaic_0001>
module attributes {stable_mosaic.version = 11 : i64} {
  func.func @_fused_mlp_kernel(%arg0: i32, %arg1: memref<16x4xf32, #tpu.memory_space<vmem>>, %arg2: memref<32x16xf32, #tpu.memory_space<vmem>>, %arg3: memref<32x1xf32, #tpu.memory_space<vmem>>, %arg4: memref<8x32xf32, #tpu.memory_space<vmem>>, %arg5: memref<8x1xf32, #tpu.memory_space<vmem>>, %arg6: memref<8x4xf32, #tpu.memory_space<vmem>>) attributes {dimension_semantics = [#tpu.dimension_semantics<parallel>], iteration_bounds = array<i64: 1>, scalar_prefetch = 0 : i64, scratch_operands = 0 : i64, tpu.core_type = #tpu.core_type<tc>, window_params = [{transform_indices = @transform_0, window_bounds = array<i64: 16, 4>}, {pipeline_mode = #tpu.pipeline_mode<synchronous>, transform_indices = @transform_1, window_bounds = array<i64: 32, 16>}, {pipeline_mode = #tpu.pipeline_mode<synchronous>, transform_indices = @transform_2, window_bounds = array<i64: 32, 1>}, {pipeline_mode = #tpu.pipeline_mode<synchronous>, transform_indices = @transform_3, window_bounds = array<i64: 8, 32>}, {pipeline_mode = #tpu.pipeline_mode<synchronous>, transform_indices = @transform_4, window_bounds = array<i64: 8, 1>}, {transform_indices = @transform_5, window_bounds = array<i64: 8, 4>}]} {
    %c0 = arith.constant 0 : index
    %c0_0 = arith.constant 0 : index
    %0 = vector.load %arg1[%c0, %c0_0] : memref<16x4xf32, #tpu.memory_space<vmem>>, vector<16x4xf32>
    %c0_1 = arith.constant 0 : index
    %c0_2 = arith.constant 0 : index
    %1 = vector.load %arg2[%c0_1, %c0_2] : memref<32x16xf32, #tpu.memory_space<vmem>>, vector<32x16xf32>
    %c0_3 = arith.constant 0 : index
    %c0_4 = arith.constant 0 : index
    %2 = vector.load %arg3[%c0_3, %c0_4] : memref<32x1xf32, #tpu.memory_space<vmem>>, vector<32x1xf32>
    %cst = arith.constant dense<0.000000e+00> : vector<32x4xf32>
    %3 = tpu.matmul %1, %0, %cst {dimension_numbers = #tpu.dot_dimension_numbers<[1], [0], [0], [1], [0, 0, 1, 1], [], []>} : vector<32x16xf32>, vector<16x4xf32>, vector<32x4xf32> -> vector<32x4xf32>
    %4 = vector.broadcast %2 : vector<32x1xf32> to vector<32x4xf32>
    %5 = arith.addf %3, %4 : vector<32x4xf32>
    %cst_5 = arith.constant 2.000000e-01 : f32
    %6 = vector.broadcast %cst_5 : f32 to vector<32x4xf32>
    %7 = arith.mulf %6, %5 : vector<32x4xf32>
    %8 = arith.maximumf %5, %7 : vector<32x4xf32>
    %c0_6 = arith.constant 0 : index
    %c0_7 = arith.constant 0 : index
    %9 = vector.load %arg4[%c0_6, %c0_7] : memref<8x32xf32, #tpu.memory_space<vmem>>, vector<8x32xf32>
    %c0_8 = arith.constant 0 : index
    %c0_9 = arith.constant 0 : index
    %10 = vector.load %arg5[%c0_8, %c0_9] : memref<8x1xf32, #tpu.memory_space<vmem>>, vector<8x1xf32>
    %cst_10 = arith.constant dense<0.000000e+00> : vector<8x4xf32>
    %11 = tpu.matmul %9, %8, %cst_10 {dimension_numbers = #tpu.dot_dimension_numbers<[1], [0], [0], [1], [0, 0, 1, 1], [], []>} : vector<8x32xf32>, vector<32x4xf32>, vector<8x4xf32> -> vector<8x4xf32>
    %12 = vector.broadcast %10 : vector<8x1xf32> to vector<8x4xf32>
    %13 = arith.addf %11, %12 : vector<8x4xf32>
    %cst_11 = arith.constant 2.000000e-01 : f32
    %14 = vector.broadcast %cst_11 : f32 to vector<8x4xf32>
    %15 = arith.mulf %14, %13 : vector<8x4xf32>
    %16 = arith.maximumf %13, %15 : vector<8x4xf32>
    %c0_12 = arith.constant 0 : index
    %c0_13 = arith.constant 0 : index
    %17 = vector.load %arg6[%c0_12, %c0_13] : memref<8x4xf32, #tpu.memory_space<vmem>>, vector<8x4xf32>
    tpu.vector_store %arg6[%c0_12, %c0_13], %16 {strides = array<i32>} : memref<8x4xf32, #tpu.memory_space<vmem>>, vector<8x4xf32>,
    return
  }
  func.func @transform_0(%arg0: i32) -> (i32, i32) {
    %c0_i32 = arith.constant 0 : i32
    %c0_i32_0 = arith.constant 0 : i32
    return %c0_i32, %arg0 : i32, i32
  }
  func.func @transform_1(%arg0: i32) -> (i32, i32) {
    %c0_i32 = arith.constant 0 : i32
    %c0_i32_0 = arith.constant 0 : i32
    %c0_i32_1 = arith.constant 0 : i32
    return %c0_i32, %c0_i32_0 : i32, i32
  }
  func.func @transform_2(%arg0: i32) -> (i32, i32) {
    %c0_i32 = arith.constant 0 : i32
    %c0_i32_0 = arith.constant 0 : i32
    %c0_i32_1 = arith.constant 0 : i32
    return %c0_i32, %c0_i32_0 : i32, i32
  }
  func.func @transform_3(%arg0: i32) -> (i32, i32) {
    %c0_i32 = arith.constant 0 : i32
    %c0_i32_0 = arith.constant 0 : i32
    %c0_i32_1 = arith.constant 0 : i32
    return %c0_i32, %c0_i32_0 : i32, i32
  }
  func.func @transform_4(%arg0: i32) -> (i32, i32) {
    %c0_i32 = arith.constant 0 : i32
    %c0_i32_0 = arith.constant 0 : i32
    %c0_i32_1 = arith.constant 0 : i32
    return %c0_i32, %c0_i32_0 : i32, i32
  }
  func.func @transform_5(%arg0: i32) -> (i32, i32) {
    %c0_i32 = arith.constant 0 : i32
    %c0_i32_0 = arith.constant 0 : i32
    return %c0_i32, %arg0 : i32, i32
  }
}

</mosaic_0001>

<llo_original>
// kernel: tpu_custom_call.1
$region0: #{tpu_custom_call.1}
  #allocation0 [shape = 'u32[]', space=smem, size = 0x4, offset = 0x4, fixed_abs, tag = 'smem constant byte address 0x4 - core index']
  #allocation1 [shape = 'u32[144,128]{1,0:T(1,128)}', space=vmem, size = 0x12000, scoped, tag = 'internal scratch']
  %s0 = inlined_call_operand.vmem [shape: f32[16,4], index: 0, kind: input, shape index: {}]
  %s1 = inlined_call_operand.vmem [shape: f32[32,16], index: 1, kind: input, shape index: {}]
  %s2 = inlined_call_operand.vmem [shape: f32[32,1], index: 2, kind: input, shape index: {}]
  %s3 = inlined_call_operand.vmem [shape: f32[8,32], index: 3, kind: input, shape index: {}]
  %s4 = inlined_call_operand.vmem [shape: f32[8,1], index: 4, kind: input, shape index: {}]
  %s5 = inlined_call_operand.vmem [shape: f32[8,4], index: 5, kind: output, shape index: {}]
  %s6 = sld [smem:[#allocation0]]
  $region30: #{tpu_custom_call.1} parent=0
    _
  %s8 = ssub.s32 1, %s6
  %s9 = scalar_select 0, %s8, %s6
  // Predicated region
  $region2: #{tpu_custom_call.1} parent=0 // pred_check
    _
  $region3: #{tpu_custom_call.1} parent=0 // pred_check_branch
    %11 = sbr.rel (0) target = $region5
  $region4: #{tpu_custom_call.1} parent=0 // pred_region
    _
  $region5: #{tpu_custom_call.1} parent=0 // pred_fallthru
    _
  // Predicated region
  $region6: #{tpu_custom_call.1} parent=0 // pred_check
    _
  $region7: #{tpu_custom_call.1} parent=0 // pred_check_branch
    %13 = sbr.rel (0) target = $region9
  $region8: #{tpu_custom_call.1} parent=0 // pred_region
    _
  $region9: #{tpu_custom_call.1} parent=0 // pred_fallthru
    _
  // Predicated region
  $region10: #{tpu_custom_call.1} parent=0 // pred_check
    _
  $region11: #{tpu_custom_call.1} parent=0 // pred_check_branch
    %15 = sbr.rel (0) target = $region13
  $region12: #{tpu_custom_call.1} parent=0 // pred_region
    _
  $region13: #{tpu_custom_call.1} parent=0 // pred_fallthru
    _
  // Predicated region
  $region14: #{tpu_custom_call.1} parent=0 // pred_check
    _
  $region15: #{tpu_custom_call.1} parent=0 // pred_check_branch
    %17 = sbr.rel (0) target = $region17
  $region16: #{tpu_custom_call.1} parent=0 // pred_region
    _
  $region17: #{tpu_custom_call.1} parent=0 // pred_fallthru
    _
  // Predicated region
  $region18: #{tpu_custom_call.1} parent=0 // pred_check
    _
  $region19: #{tpu_custom_call.1} parent=0 // pred_check_branch
    %19 = sbr.rel (0) target = $region21
  $region20: #{tpu_custom_call.1} parent=0 // pred_region
    _
  $region21: #{tpu_custom_call.1} parent=0 // pred_fallthru
    _
  %v20 = vld [vmem:[%s0] sm:$0xff]
  %v21 = vld [vmem:[%s0 + $0x8] sm:$0xff]
  %v22 = vld [vmem:[%s1] sm:$0xff]
  %v23 = vld [vmem:[%s1 + $0x8] sm:$0xff]
  %v24 = vld [vmem:[%s1 + $0x10] sm:$0xff]
  %v25 = vld [vmem:[%s1 + $0x18] sm:$0xff]
  %v26 = vld [vmem:[%s2] sm:$0xff]
  %v27 = vld [vmem:[%s2 + $0x8] sm:$0xff]
  %v28 = vld [vmem:[%s2 + $0x10] sm:$0xff]
  %v29 = vld [vmem:[%s2 + $0x18] sm:$0xff]
  %31 = vset.pattern.permute.xlu0 0
  %32 = vperm.xlu0 %31, %v26
  %v33 = vpop.permute.xlu0 %32
  %36 = vset.pattern.permute.xlu0 0
  %37 = vperm.xlu0 %36, %v27
  %v38 = vpop.permute.xlu0 %37
  %41 = vset.pattern.permute.xlu0 0
  %42 = vperm.xlu0 %41, %v28
  %v43 = vpop.permute.xlu0 %42
  %46 = vset.pattern.permute.xlu0 0
  %47 = vperm.xlu0 %46, %v29
  %v48 = vpop.permute.xlu0 %47
  %vm50 = vcmask 130048
  %v52 = vsel %vm50, %v22, 0
  %v55 = vsel %vm50, %v23, 0
  %v58 = vsel %vm50, %v24, 0
  %v61 = vsel %vm50, %v25, 0
  %63 = vmatprep.subr.mxu0 0.0
  %64 = vmatpush1.msra.mxu0 0.0
  %65 = vmatprep.subr.mxu0 0.0
  %66 = vmatpush1.msra.mxu0 0.0
  %67 = vmatprep.subr.mxu0 0.0
  %68 = vmatpush1.msra.mxu0 0.0
  %69 = vmatprep.subr.mxu0 0.0
  %70 = vmatpush1.msra.mxu0 0.0
  %71 = vmatprep.subr.mxu0 0.0
  %72 = vmatpush1.msra.mxu0 0.0
  %73 = vmatprep.subr.mxu0 0.0
  %74 = vmatpush1.msra.mxu0 0.0
  %75 = vmatprep.subr.mxu0 0.0
  %76 = vmatpush1.msra.mxu0 0.0
  %77 = vmatprep.subr.mxu0 0.0
  %78 = vmatpush1.msra.mxu0 0.0
  %79 = vmatprep.subr.mxu0 0.0
  %80 = vmatpush1.msra.mxu0 0.0
  %81 = vmatprep.subr.mxu0 0.0
  %82 = vmatpush1.msra.mxu0 0.0
  %83 = vmatprep.subr.mxu0 0.0
  %84 = vmatpush1.msra.mxu0 0.0
  %85 = vmatprep.subr.mxu0 0.0
  %86 = vmatpush1.msra.mxu0 0.0
  %87 = vmatprep.subr.mxu0 0.0
  %88 = vmatpush1.msra.mxu0 0.0
  %89 = vmatprep.subr.mxu0 0.0
  %90 = vmatpush1.msra.mxu0 0.0
  %91 = vmatprep.subr.mxu0 0.0
  %92 = vmatpush1.msra.mxu0 %v21
  %93 = vmatprep.subr.mxu0 0.0
  %94 = vmatpush1.msra.mxu0 %v20
  %95 = vmatprep.subr.mxu0 0.0
  %96 = vmatpush2.msra.mxu0 0.0
  %97 = vmatprep.subr.mxu0 0.0
  %98 = vmatpush2.msra.mxu0 0.0
  %99 = vmatprep.subr.mxu0 0.0
  %100 = vmatpush2.msra.mxu0 0.0
  %101 = vmatprep.subr.mxu0 0.0
  %102 = vmatpush2.msra.mxu0 0.0
  %103 = vmatprep.subr.mxu0 0.0
  %104 = vmatpush2.msra.mxu0 0.0
  %105 = vmatprep.subr.mxu0 0.0
  %106 = vmatpush2.msra.mxu0 0.0
  %107 = vmatprep.subr.mxu0 0.0
  %108 = vmatpush2.msra.mxu0 0.0
  %109 = vmatprep.subr.mxu0 0.0
  %110 = vmatpush2.msra.mxu0 0.0
  %111 = vmatprep.subr.mxu0 0.0
  %112 = vmatpush2.msra.mxu0 0.0
  %113 = vmatprep.subr.mxu0 0.0
  %114 = vmatpush2.msra.mxu0 0.0
  %115 = vmatprep.subr.mxu0 0.0
  %116 = vmatpush2.msra.mxu0 0.0
  %117 = vmatprep.subr.mxu0 0.0
  %118 = vmatpush2.msra.mxu0 0.0
  %119 = vmatprep.subr.mxu0 0.0
  %120 = vmatpush2.msra.mxu0 0.0
  %121 = vmatprep.subr.mxu0 0.0
  %122 = vmatpush2.msra.mxu0 0.0
  %123 = vmatprep.subr.mxu0 0.0
  %124 = vmatpush2.msra.mxu0 0.0
  %125 = vmatprep.subr.mxu0 0.0
  %126 = vmatpush2.msra.mxu0 0.0
  %127 = vmatprep.mubr.f32.mxu0 0.0
  %128 = vmatmul.mubr.f32.gmra.mxu0 %v52
  %v129 = vpop.f32.mrf.mxu0
  %v130 = vadd.f32 %v33, %v129
  %v131 = vpop.f32.mrf.mxu0
  %132 = vmatprep.mubr.f32.mxu0 0.0
  %133 = vmatmul.mubr.f32.gmra.mxu0 %v55
  %v134 = vpop.f32.mrf.mxu0
  %v135 = vadd.f32 %v38, %v134
  %v136 = vpop.f32.mrf.mxu0
  %137 = vmatprep.mubr.f32.mxu0 0.0
  %138 = vmatmul.mubr.f32.gmra.mxu0 %v58
  %v139 = vpop.f32.mrf.mxu0
  %v140 = vadd.f32 %v43, %v139
  %v141 = vpop.f32.mrf.mxu0
  %142 = vmatprep.mubr.f32.mxu0 0.0
  %143 = vmatmul.mubr.f32.gmra.mxu0 %v61
  %v144 = vpop.f32.mrf.mxu0
  %v145 = vadd.f32 %v48, %v144
  %v146 = vpop.f32.mrf.mxu0
  %147 = vdwg.mxu0
  %v148 = vmul.f32 %v130, 0.2
  %v149 = vmul.f32 %v135, 0.2
  %v150 = vmul.f32 %v140, 0.2
  %v151 = vmul.f32 %v145, 0.2
  %v152 = vmax.f32 %v130, %v148
  %v153 = vmax.f32 %v135, %v149
  %v154 = vmax.f32 %v140, %v150
  %v155 = vmax.f32 %v145, %v151
  %v156 = vld [vmem:[%s3] sm:$0xff]
  %v157 = vld [vmem:[%s4] sm:$0xff]
  %159 = vset.pattern.permute.xlu0 0
  %160 = vperm.xlu0 %159, %v157
  %v161 = vpop.permute.xlu0 %160
  %vm163 = vcmask 261120
  %v165 = vsel %vm163, %v156, 0
  %167 = vmatprep.subr.mxu0 0.0
  %168 = vmatpush1.msra.mxu0 0.0
  %169 = vmatprep.subr.mxu0 0.0
  %170 = vmatpush1.msra.mxu0 0.0
  %171 = vmatprep.subr.mxu0 0.0
  %172 = vmatpush1.msra.mxu0 0.0
  %173 = vmatprep.subr.mxu0 0.0
  %174 = vmatpush1.msra.mxu0 0.0
  %175 = vmatprep.subr.mxu0 0.0
  %176 = vmatpush1.msra.mxu0 0.0
  %177 = vmatprep.subr.mxu0 0.0
  %178 = vmatpush1.msra.mxu0 0.0
  %179 = vmatprep.subr.mxu0 0.0
  %180 = vmatpush1.msra.mxu0 0.0
  %181 = vmatprep.subr.mxu0 0.0
  %182 = vmatpush1.msra.mxu0 0.0
  %183 = vmatprep.subr.mxu0 0.0
  %184 = vmatpush1.msra.mxu0 0.0
  %185 = vmatprep.subr.mxu0 0.0
  %186 = vmatpush1.msra.mxu0 0.0
  %187 = vmatprep.subr.mxu0 0.0
  %188 = vmatpush1.msra.mxu0 0.0
  %189 = vmatprep.subr.mxu0 0.0
  %190 = vmatpush1.msra.mxu0 0.0
  %191 = vmatprep.subr.mxu0 0.0
  %192 = vmatpush1.msra.mxu0 %v155
  %193 = vmatprep.subr.mxu0 0.0
  %194 = vmatpush1.msra.mxu0 %v154
  %195 = vmatprep.subr.mxu0 0.0
  %196 = vmatpush1.msra.mxu0 %v153
  %197 = vmatprep.subr.mxu0 0.0
  %198 = vmatpush1.msra.mxu0 %v152
  %199 = vmatprep.subr.mxu0 0.0
  %200 = vmatpush2.msra.mxu0 0.0
  %201 = vmatprep.subr.mxu0 0.0
  %202 = vmatpush2.msra.mxu0 0.0
  %203 = vmatprep.subr.mxu0 0.0
  %204 = vmatpush2.msra.mxu0 0.0
  %205 = vmatprep.subr.mxu0 0.0
  %206 = vmatpush2.msra.mxu0 0.0
  %207 = vmatprep.subr.mxu0 0.0
  %208 = vmatpush2.msra.mxu0 0.0
  %209 = vmatprep.subr.mxu0 0.0
  %210 = vmatpush2.msra.mxu0 0.0
  %211 = vmatprep.subr.mxu0 0.0
  %212 = vmatpush2.msra.mxu0 0.0
  %213 = vmatprep.subr.mxu0 0.0
  %214 = vmatpush2.msra.mxu0 0.0
  %215 = vmatprep.subr.mxu0 0.0
  %216 = vmatpush2.msra.mxu0 0.0
  %217 = vmatprep.subr.mxu0 0.0
  %218 = vmatpush2.msra.mxu0 0.0
  %219 = vmatprep.subr.mxu0 0.0
  %220 = vmatpush2.msra.mxu0 0.0
  %221 = vmatprep.subr.mxu0 0.0
  %222 = vmatpush2.msra.mxu0 0.0
  %223 = vmatprep.subr.mxu0 0.0
  %224 = vmatpush2.msra.mxu0 0.0
  %225 = vmatprep.subr.mxu0 0.0
  %226 = vmatpush2.msra.mxu0 0.0
  %227 = vmatprep.subr.mxu0 0.0
  %228 = vmatpush2.msra.mxu0 0.0
  %229 = vmatprep.subr.mxu0 0.0
  %230 = vmatpush2.msra.mxu0 0.0
  %231 = vmatprep.mubr.f32.mxu0 0.0
  %232 = vmatmul.mubr.f32.gmra.mxu0 %v165
  %v233 = vpop.f32.mrf.mxu0
  %v234 = vadd.f32 %v161, %v233
  %v235 = vpop.f32.mrf.mxu0
  %236 = vdwg.mxu0
  %v237 = vmul.f32 %v234, 0.2
  %v238 = vmax.f32 %v234, %v237
  %vm239 = vcmask 31744
  %240 = vst.msk [vmem:[%s5] sm:$0xff] %vm239, %v238
  // Predicated region
  $region22: #{tpu_custom_call.1} parent=0 // pred_check
    _
  $region23: #{tpu_custom_call.1} parent=0 // pred_check_branch
    %242 = sbr.rel (0) target = $region25
  $region24: #{tpu_custom_call.1} parent=0 // pred_region
    _
  $region25: #{tpu_custom_call.1} parent=0 // pred_fallthru
    _
  // Predicated region
  $region26: #{tpu_custom_call.1} parent=0 // pred_check
    _
  $region27: #{tpu_custom_call.1} parent=0 // pred_check_branch
    %244 = sbr.rel (0) target = $region29
  $region28: #{tpu_custom_call.1} parent=0 // pred_region
    _
  $region29: #{tpu_custom_call.1} parent=0 // pred_fallthru
    _

</llo_original>
